<compile_context>
chip_gen: v5e
topology: v5e:2x2
jax: 0.10.0
libtpu: 0.0.40
codegen_flags: <defaults>
</compile_context>

<pallas_src>
import jax
import jax.numpy as jnp
from jax.experimental import pallas as pl
from jax.experimental.pallas import tpu as pltpu

_LANE = 128


def _round_up(x, m):
    return ((x + m - 1) // m) * m


def _pad2(a, rows, cols, dtype):
    """Zero-pad a 2-D array to (rows, cols) and cast."""
    out = jnp.zeros((rows, cols), dtype)
    return out.at[: a.shape[0], : a.shape[1]].set(a.astype(dtype))


# ----------------------------------------------------------------------------
# Fused kernel: pred_pref stack, then pred_action stack, both heads in one call.
# Layer structure matches construct_layers: first Linear (no act),
# hidden Linears + ReLU (+Dropout == identity in eval), last Linear (no act).
# ----------------------------------------------------------------------------
def _make_fused_kernel(n_pref, n_act, sa_pad, z_pad, pref_cols, act_cols):
    n_w = n_pref + n_act + 1   # pref linears + (split first act linear) + rest

    def kernel(*refs):
        feat_ref = refs[0]
        w = refs[1:1 + n_w]
        bias_ref = refs[1 + n_w]          # (n_pref + n_act, c_max) f32
        out_ref = refs[2 + n_w]           # (tile_m, z_pad + v_pad)
        cdt = feat_ref.dtype              # compute dtype fed to the MXU

        def bias(i, c):
            return bias_ref[i:i + 1, :c]  # f32 (1, c), broadcasts over rows

        # ---------------- pred_pref ----------------
        h = feat_ref[...]
        y = None
        for li in range(n_pref):
            y = (jnp.dot(h, w[li][...], preferred_element_type=jnp.float32)
                 + bias(li, pref_cols[li]))
            if 0 < li < n_pref - 1:       # ReLU only on hidden layers
                y = jnp.maximum(y, 0.0)
            h = y.astype(cdt)
        out_ref[:, :z_pad] = y.astype(out_ref.dtype)
        prefs = h                         # final pref activations, compute dtype

        # ---------------- pred_action ----------------
        # First Linear split into two partial dots:
        #   act_in = [prefs | state_f, ah_f] ==> prefs @ W_z + feat[:, :sa_pad] @ W_sa
        # (rows of W_sa beyond the real state/ah columns are zero, so the extra
        #  prev_* feature columns inside the padded slice contribute nothing).
        y = (jnp.dot(prefs, w[n_pref][...], preferred_element_type=jnp.float32)
             + jnp.dot(feat_ref[:, :sa_pad], w[n_pref + 1][...],
                       preferred_element_type=jnp.float32)
             + bias(n_pref, act_cols[0]))
        h = y.astype(cdt)
        for li in range(1, n_act):
            y = (jnp.dot(h, w[n_pref + 1 + li][...],
                         preferred_element_type=jnp.float32)
                 + bias(n_pref + li, act_cols[li]))
            if li < n_act - 1:
                y = jnp.maximum(y, 0.0)
            h = y.astype(cdt)
        out_ref[:, z_pad:] = y.astype(out_ref.dtype)

    return kernel


# ----------------------------------------------------------------------------
# Parameter construction (PyTorch-like shapes / init)
# ----------------------------------------------------------------------------
def init_linear(key, d_in, d_out):
    kw, kb = jax.random.split(key)
    lim = 1.0 / jnp.sqrt(jnp.float32(d_in))
    w = jax.random.uniform(kw, (d_in, d_out), jnp.float32, -lim, lim)
    b = jax.random.uniform(kb, (1, d_out), jnp.float32, -lim, lim)
    return w, b


def build_mlp_params(key, layer_dims):
    ws, bs = [], []
    for i in range(len(layer_dims) - 1):
        key, sub = jax.random.split(key)
        w, b = init_linear(sub, layer_dims[i], layer_dims[i + 1])
        ws.append(w)
        bs.append(b)
    return ws, bs


# ----------------------------------------------------------------------------
# PreferenceMLP in JAX (embedding glue + both fused MLP heads, all under jit)
# ----------------------------------------------------------------------------
class PreferenceMLPJax:
    def __init__(self, key, *, sz_vocab, d_embed, K, n_pref_layers, n_act_layers,
                 pdrop, d_hidden, n_objects, n_locations, sz_state,
                 param_dtype=jnp.bfloat16, out_dtype=jnp.float32, max_tile_m=None):
        assert n_pref_layers >= 1 and n_act_layers >= 1
        self.sz_vocab = sz_vocab
        self.d_embed = d_embed
        self.K = K
        self.sz_state = sz_state
        self.d_hidden = d_hidden
        self.param_dtype = param_dtype
        self.out_dtype = out_dtype
        if max_tile_m is None:
            # bf16 activations allow bigger tiles at the same VMEM footprint
            max_tile_m = 1024 if jnp.dtype(param_dtype).itemsize <= 2 else 512
        self.max_tile_m = max_tile_m

        n_states = sz_state * (K + 1)
        n_ah_vocabs = K + 1
        n_ar_vocabs = K
        self.sz_z = int(n_objects * n_locations)
        self.sz_sa = d_embed * (sz_state + 1)   # state_f + action_h_f columns
        self.d_pref_in = d_embed * n_states + (n_ah_vocabs + n_ar_vocabs) * d_embed
        self.d_act_in = self.sz_z + self.sz_sa

        k_emb, k_pref, k_act = jax.random.split(key, 3)
        self.emb = jax.random.normal(k_emb, (sz_vocab, d_embed), jnp.float32)

        pref_dims = [self.d_pref_in] + [d_hidden] * (n_pref_layers + 1) + [self.sz_z]
        act_dims = [self.d_act_in] + [d_hidden] * (n_act_layers + 1) + [sz_vocab]
        self.pref_w, self.pref_b = build_mlp_params(k_pref, pref_dims)
        self.act_w, self.act_b = build_mlp_params(k_act, act_dims)
        self.n_pref = len(self.pref_w)
        self.n_act = len(self.act_w)

        # lane-dense padded dims
        self.d_in_pad = _round_up(self.d_pref_in, _LANE)
        self.h_pad = _round_up(d_hidden, _LANE)
        self.z_pad = _round_up(self.sz_z, _LANE)
        self.v_pad = _round_up(sz_vocab, _LANE)
        self.sa_pad = _round_up(self.sz_sa, _LANE)

        # per-layer padded in/out dims (static)
        self.pref_in_dims = [self.d_in_pad] + [self.h_pad] * (self.n_pref - 1)
        self.pref_out_dims = [self.h_pad] * (self.n_pref - 1) + [self.z_pad]
        self.act_out_dims = [self.h_pad] * (self.n_act - 1) + [self.v_pad]

        self._pack_kernel_params(param_dtype)
        self._forward = jax.jit(self._forward_impl)

        # TODO(synk): pred_state / pred_ah / pred_ac heads exist in the PyTorch
        # module but are never used by forward(); intentionally not implemented.

    # --- pad + cast parameters into the flat list the fused kernel expects ----
    def _pack_kernel_params(self, dtype):
        kw = []
        for li, w in enumerate(self.pref_w):
            kw.append(_pad2(w, self.pref_in_dims[li], self.pref_out_dims[li], dtype))
        # action head first Linear split: rows [0:sz_z] act on prefs,
        # rows [sz_z:] act on [state_f, ah_f] (padded rows are zero).
        w0 = self.act_w[0]
        kw.append(_pad2(w0[: self.sz_z], self.z_pad, self.act_out_dims[0], dtype))
        kw.append(_pad2(w0[self.sz_z:], self.sa_pad, self.act_out_dims[0], dtype))
        for li in range(1, self.n_act):
            kw.append(_pad2(self.act_w[li], self.h_pad, self.act_out_dims[li], dtype))
        self.kw = kw

        # all biases packed into one small f32 operand (one DMA, one buffer)
        c_max = max(self.pref_out_dims + self.act_out_dims)
        n_bias = self.n_pref + self.n_act
        kb = jnp.zeros((n_bias, c_max), jnp.float32)
        for li, b in enumerate(self.pref_b):
            kb = kb.at[li, : b.shape[1]].set(b[0].astype(jnp.float32))
        for li, b in enumerate(self.act_b):
            kb = kb.at[self.n_pref + li, : b.shape[1]].set(b[0].astype(jnp.float32))
        self.kb = kb

    # ------------------------------------------------------------------------
    def get_features(self, tokens, B, S):
        return jnp.take(self.emb, tokens, axis=0).reshape(B, S, -1)

    def _forward_impl(self, state, action_h, prev_states, prev_actions_h,
                      prev_actions_c, timesteps):
        B, S = state.shape[0], state.shape[1]
        state_f = self.get_features(state, B, S)
        ah_f = self.get_features(action_h, B, S)
        # [state_f, ah_f] occupy the leading columns so the fused kernel can
        # re-read them for the action head (no second concat / copy).
        features = jnp.concatenate(
            [state_f, ah_f]
            + [self.get_features(p, B, S) for p in prev_states]
            + [self.get_features(p, B, S) for p in prev_actions_h]
            + [self.get_features(p, B, S) for p in prev_actions_c], axis=-1)

        M = B * S
        dt = self.param_dtype
        feats = features.reshape(M, self.d_pref_in).astype(dt)

        # Adaptive row tiling: >=2 parallel grid steps when possible (v7x dual
        # TC / megacore), near-equal 8-aligned tiles (<=7 dead rows per tile).
        n_tiles = max(2, -(-M // self.max_tile_m))
        tile_m = max(8, _round_up(-(-M // n_tiles), 8))
        m_pad = _round_up(M, tile_m)
        grid = (m_pad // tile_m,)

        # Row/lane padding fuses with the gather+concat+cast under jit.
        feat_p = jnp.pad(feats, ((0, m_pad - M),
                                 (0, self.d_in_pad - self.d_pref_in)))

        kernel = _make_fused_kernel(self.n_pref, self.n_act, self.sa_pad,
                                    self.z_pad, tuple(self.pref_out_dims),
                                    tuple(self.act_out_dims))

        out_cols = self.z_pad + self.v_pad
        out_shape = jax.ShapeDtypeStruct((m_pad, out_cols), self.out_dtype)

        in_specs = [pl.BlockSpec((tile_m, self.d_in_pad), lambda i: (i, 0))]
        in_specs += [pl.BlockSpec(wp.shape, lambda i: (0, 0)) for wp in self.kw]
        in_specs += [pl.BlockSpec(self.kb.shape, lambda i: (0, 0))]
        out_specs = pl.BlockSpec((tile_m, out_cols), lambda i: (i, 0))

        bpe = jnp.dtype(dt).itemsize
        obpe = jnp.dtype(self.out_dtype).itemsize
        w_bytes = sum(int(p.size) * bpe for p in self.kw) + int(self.kb.size) * 4
        act_bytes = 2 * tile_m * (self.d_in_pad * bpe + out_cols * obpe)
        need = act_bytes + 2 * w_bytes
        vmem_limit = int(min(max(2 * need, 16 << 20), 32 << 20))

        out = pl.pallas_call(
            kernel,
            out_shape=out_shape,
            grid_spec=pltpu.PrefetchScalarGridSpec(
                num_scalar_prefetch=0,
                grid=grid,
                in_specs=in_specs,
                out_specs=out_specs,
            ),
            compiler_params=pltpu.CompilerParams(
                dimension_semantics=("parallel",),
                vmem_limit_bytes=vmem_limit,
            ),
        )(feat_p, *self.kw, self.kb)

        prefs = out[:M, : self.sz_z].astype(jnp.float32).reshape(B, S, self.sz_z)
        acts = out[:M, self.z_pad: self.z_pad + self.sz_vocab].astype(
            jnp.float32).reshape(B, S, self.sz_vocab)
        return {"action_r_preds": acts, "theta_preds": prefs}

    def __call__(self, state, action_h, prev_states, prev_actions_h,
                 prev_actions_c, timesteps):
        return self._forward(state, action_h, prev_states, prev_actions_h,
                             prev_actions_c, timesteps)

    # pure-jnp reference (high-precision, f32 params) for validating the kernel
    def reference(self, state, action_h, prev_states, prev_actions_h,
                  prev_actions_c, timesteps):
        hi = jax.lax.Precision.HIGHEST

        def mlp_ref(x, ws, bs):
            h = x
            n = len(ws)
            for li, (w, b) in enumerate(zip(ws, bs)):
                h = jnp.dot(h, w, precision=hi) + b
                if 0 < li < n - 1:
                    h = jnp.maximum(h, 0.0)
            return h

        B, S = state.shape[0], state.shape[1]
        state_f = self.get_features(state, B, S)
        ah_f = self.get_features(action_h, B, S)
        prev_state_f = [self.get_features(p, B, S) for p in prev_states]
        prev_ah_f = [self.get_features(p, B, S) for p in prev_actions_h]
        prev_ac_f = [self.get_features(p, B, S) for p in prev_actions_c]
        features = jnp.concatenate(
            [state_f, ah_f] + prev_state_f + prev_ah_f + prev_ac_f, axis=-1)
        M = B * S
        prefs = mlp_ref(features.reshape(M, -1), self.pref_w, self.pref_b).reshape(B, S, -1)
        act_in = jnp.concatenate([prefs, state_f, ah_f], axis=-1)
        acts = mlp_ref(act_in.reshape(M, -1), self.act_w, self.act_b).reshape(B, S, -1)
        return {"action_r_preds": acts, "theta_preds": prefs}


# ----------------------------------------------------------------------------
if __name__ == "__main__":
    cfg = dict(
        sz_vocab=32, d_embed=8, K=2, n_pref_layers=2, n_act_layers=2,
        pdrop=0.1, d_hidden=32, n_objects=4, n_locations=5, sz_state=4,
    )

    def make_inputs(key, B, S):
        K = cfg["K"]
        keys = jax.random.split(key, 2 + 3 * K)
        state = jax.random.randint(keys[0], (B, S, cfg["sz_state"]), 0, cfg["sz_vocab"])
        action_h = jax.random.randint(keys[1], (B, S, 1), 0, cfg["sz_vocab"])
        prev_states = [jax.random.randint(keys[2 + i], (B, S, cfg["sz_state"]),
                                          0, cfg["sz_vocab"]) for i in range(K)]
        prev_actions_h = [jax.random.randint(keys[2 + K + i], (B, S, 1),
                                             0, cfg["sz_vocab"]) for i in range(K)]
        prev_actions_c = [jax.random.randint(keys[2 + 2 * K + i], (B, S, 1),
                                             0, cfg["sz_vocab"]) for i in range(K)]
        timesteps = jnp.tile(jnp.arange(S)[None, :], (B, 1))
        return state, action_h, prev_states, prev_actions_h, prev_actions_c, timesteps

    key = jax.random.PRNGKey(0)
    k_model, k_in1, k_in2 = jax.random.split(key, 3)

    # --- f32 model (strict check), small shapes (B=2, S=8 -> M=16, 2 tiles) ---
    model_f32 = PreferenceMLPJax(k_model, **cfg, param_dtype=jnp.float32)
    inputs = make_inputs(k_in1, 2, 8)
    out = model_f32(*inputs)
    jax.block_until_ready(out)
    ref = model_f32.reference(*inputs)
    assert out["theta_preds"].shape == (2, 8, cfg["n_objects"] * cfg["n_locations"])
    assert out["action_r_preds"].shape == (2, 8, cfg["sz_vocab"])
    assert jnp.allclose(out["theta_preds"], ref["theta_preds"], atol=2e-2, rtol=2e-2)
    assert jnp.allclose(out["action_r_preds"], ref["action_r_preds"], atol=2e-2, rtol=2e-2)

    # --- odd M (M=288) -> adaptive tiles (2 x 144), no dead-row padding -------
    inputs_big = make_inputs(k_in2, 4, 72)
    out_big = model_f32(*inputs_big)
    jax.block_until_ready(out_big)
    ref_big = model_f32.reference(*inputs_big)
    assert jnp.allclose(out_big["theta_preds"], ref_big["theta_preds"], atol=2e-2, rtol=2e-2)
    assert jnp.allclose(out_big["action_r_preds"], ref_big["action_r_preds"], atol=2e-2, rtol=2e-2)

    # --- default bf16 params/activations (all generations), f32 accumulate ----
    model = PreferenceMLPJax(k_model, **cfg)            # param_dtype=bf16 default
    out_bf = model(*inputs)
    jax.block_until_ready(out_bf)
    ref_bf = model.reference(*inputs)                   # reference uses raw f32 params
    assert jnp.allclose(out_bf["theta_preds"], ref_bf["theta_preds"], atol=1e-1, rtol=1e-1)
    assert jnp.allclose(out_bf["action_r_preds"], ref_bf["action_r_preds"], atol=1e-1, rtol=1e-1)

    print("KERNEL_OK")
</pallas_src>

<mosaic_0001>
module attributes {stable_mosaic.version = 11 : i64} {
  func.func @kernel(%arg0: i32, %arg1: memref<8x256xf32, #tpu.memory_space<vmem>>, %arg2: memref<256x128xf32, #tpu.memory_space<vmem>>, %arg3: memref<128x128xf32, #tpu.memory_space<vmem>>, %arg4: memref<128x128xf32, #tpu.memory_space<vmem>>, %arg5: memref<128x128xf32, #tpu.memory_space<vmem>>, %arg6: memref<128x128xf32, #tpu.memory_space<vmem>>, %arg7: memref<128x128xf32, #tpu.memory_space<vmem>>, %arg8: memref<128x128xf32, #tpu.memory_space<vmem>>, %arg9: memref<128x128xf32, #tpu.memory_space<vmem>>, %arg10: memref<128x128xf32, #tpu.memory_space<vmem>>, %arg11: memref<8x128xf32, #tpu.memory_space<vmem>>, %arg12: memref<8x256xf32, #tpu.memory_space<vmem>>) attributes {dimension_semantics = [#tpu.dimension_semantics<parallel>], iteration_bounds = array<i64: 2>, scalar_prefetch = 0 : i64, scratch_operands = 0 : i64, tpu.core_type = #tpu.core_type<tc>, window_params = [{transform_indices = @transform_0, window_bounds = array<i64: 8, 256>}, {pipeline_mode = #tpu.pipeline_mode<synchronous>, transform_indices = @transform_1, window_bounds = array<i64: 256, 128>}, {pipeline_mode = #tpu.pipeline_mode<synchronous>, transform_indices = @transform_2, window_bounds = array<i64: 128, 128>}, {pipeline_mode = #tpu.pipeline_mode<synchronous>, transform_indices = @transform_3, window_bounds = array<i64: 128, 128>}, {pipeline_mode = #tpu.pipeline_mode<synchronous>, transform_indices = @transform_4, window_bounds = array<i64: 128, 128>}, {pipeline_mode = #tpu.pipeline_mode<synchronous>, transform_indices = @transform_5, window_bounds = array<i64: 128, 128>}, {pipeline_mode = #tpu.pipeline_mode<synchronous>, transform_indices = @transform_6, window_bounds = array<i64: 128, 128>}, {pipeline_mode = #tpu.pipeline_mode<synchronous>, transform_indices = @transform_7, window_bounds = array<i64: 128, 128>}, {pipeline_mode = #tpu.pipeline_mode<synchronous>, transform_indices = @transform_8, window_bounds = array<i64: 128, 128>}, {pipeline_mode = #tpu.pipeline_mode<synchronous>, transform_indices = @transform_9, window_bounds = array<i64: 128, 128>}, {pipeline_mode = #tpu.pipeline_mode<synchronous>, transform_indices = @transform_10, window_bounds = array<i64: 8, 128>}, {transform_indices = @transform_11, window_bounds = array<i64: 8, 256>}]} {
    %c0 = arith.constant 0 : index
    %c0_0 = arith.constant 0 : index
    %0 = vector.load %arg1[%c0, %c0_0] : memref<8x256xf32, #tpu.memory_space<vmem>>, vector<8x256xf32>
    %c0_1 = arith.constant 0 : index
    %c0_2 = arith.constant 0 : index
    %1 = vector.load %arg2[%c0_1, %c0_2] : memref<256x128xf32, #tpu.memory_space<vmem>>, vector<256x128xf32>
    %cst = arith.constant dense<0.000000e+00> : vector<8x128xf32>
    %2 = tpu.matmul %0, %1, %cst {dimension_numbers = #tpu.dot_dimension_numbers<[1], [0], [0], [1], [0, 0, 1, 1], [], []>} : vector<8x256xf32>, vector<256x128xf32>, vector<8x128xf32> -> vector<8x128xf32>
    %c0_3 = arith.constant 0 : index
    %c0_4 = arith.constant 0 : index
    %3 = vector.load %arg11[%c0_3, %c0_4] : memref<8x128xf32, #tpu.memory_space<vmem>>, vector<1x128xf32>
    %4 = vector.broadcast %3 : vector<1x128xf32> to vector<8x128xf32>
    %5 = arith.addf %2, %4 : vector<8x128xf32>
    %c0_5 = arith.constant 0 : index
    %c0_6 = arith.constant 0 : index
    %6 = vector.load %arg3[%c0_5, %c0_6] : memref<128x128xf32, #tpu.memory_space<vmem>>, vector<128x128xf32>
    %cst_7 = arith.constant dense<0.000000e+00> : vector<8x128xf32>
    %7 = tpu.matmul %5, %6, %cst_7 {dimension_numbers = #tpu.dot_dimension_numbers<[1], [0], [0], [1], [0, 0, 1, 1], [], []>} : vector<8x128xf32>, vector<128x128xf32>, vector<8x128xf32> -> vector<8x128xf32>
    %c1 = arith.constant 1 : index
    %c0_8 = arith.constant 0 : index
    %8 = vector.load %arg11[%c1, %c0_8] : memref<8x128xf32, #tpu.memory_space<vmem>>, vector<1x128xf32>
    %9 = vector.broadcast %8 : vector<1x128xf32> to vector<8x128xf32>
    %10 = arith.addf %7, %9 : vector<8x128xf32>
    %cst_9 = arith.constant 0.000000e+00 : f32
    %11 = vector.broadcast %cst_9 : f32 to vector<8x128xf32>
    %12 = arith.maximumf %10, %11 : vector<8x128xf32>
    %c0_10 = arith.constant 0 : index
    %c0_11 = arith.constant 0 : index
    %13 = vector.load %arg4[%c0_10, %c0_11] : memref<128x128xf32, #tpu.memory_space<vmem>>, vector<128x128xf32>
    %cst_12 = arith.constant dense<0.000000e+00> : vector<8x128xf32>
    %14 = tpu.matmul %12, %13, %cst_12 {dimension_numbers = #tpu.dot_dimension_numbers<[1], [0], [0], [1], [0, 0, 1, 1], [], []>} : vector<8x128xf32>, vector<128x128xf32>, vector<8x128xf32> -> vector<8x128xf32>
    %c2 = arith.constant 2 : index
    %c0_13 = arith.constant 0 : index
    %15 = vector.load %arg11[%c2, %c0_13] : memref<8x128xf32, #tpu.memory_space<vmem>>, vector<1x128xf32>
    %16 = vector.broadcast %15 : vector<1x128xf32> to vector<8x128xf32>
    %17 = arith.addf %14, %16 : vector<8x128xf32>
    %cst_14 = arith.constant 0.000000e+00 : f32
    %18 = vector.broadcast %cst_14 : f32 to vector<8x128xf32>
    %19 = arith.maximumf %17, %18 : vector<8x128xf32>
    %c0_15 = arith.constant 0 : index
    %c0_16 = arith.constant 0 : index
    %20 = vector.load %arg5[%c0_15, %c0_16] : memref<128x128xf32, #tpu.memory_space<vmem>>, vector<128x128xf32>
    %cst_17 = arith.constant dense<0.000000e+00> : vector<8x128xf32>
    %21 = tpu.matmul %19, %20, %cst_17 {dimension_numbers = #tpu.dot_dimension_numbers<[1], [0], [0], [1], [0, 0, 1, 1], [], []>} : vector<8x128xf32>, vector<128x128xf32>, vector<8x128xf32> -> vector<8x128xf32>
    %c3 = arith.constant 3 : index
    %c0_18 = arith.constant 0 : index
    %22 = vector.load %arg11[%c3, %c0_18] : memref<8x128xf32, #tpu.memory_space<vmem>>, vector<1x128xf32>
    %23 = vector.broadcast %22 : vector<1x128xf32> to vector<8x128xf32>
    %24 = arith.addf %21, %23 : vector<8x128xf32>
    %c0_19 = arith.constant 0 : index
    %c0_20 = arith.constant 0 : index
    %25 = vector.load %arg12[%c0_19, %c0_20] : memref<8x256xf32, #tpu.memory_space<vmem>>, vector<8x128xf32>
    tpu.vector_store %arg12[%c0_19, %c0_20], %24 {strides = array<i32>} : memref<8x256xf32, #tpu.memory_space<vmem>>, vector<8x128xf32>,
    %c0_21 = arith.constant 0 : index
    %c0_22 = arith.constant 0 : index
    %26 = vector.load %arg6[%c0_21, %c0_22] : memref<128x128xf32, #tpu.memory_space<vmem>>, vector<128x128xf32>
    %cst_23 = arith.constant dense<0.000000e+00> : vector<8x128xf32>
    %27 = tpu.matmul %24, %26, %cst_23 {dimension_numbers = #tpu.dot_dimension_numbers<[1], [0], [0], [1], [0, 0, 1, 1], [], []>} : vector<8x128xf32>, vector<128x128xf32>, vector<8x128xf32> -> vector<8x128xf32>
    %c0_24 = arith.constant 0 : index
    %c0_25 = arith.constant 0 : index
    %28 = vector.load %arg1[%c0_24, %c0_25] : memref<8x256xf32, #tpu.memory_space<vmem>>, vector<8x128xf32>
    %c0_26 = arith.constant 0 : index
    %c0_27 = arith.constant 0 : index
    %29 = vector.load %arg7[%c0_26, %c0_27] : memref<128x128xf32, #tpu.memory_space<vmem>>, vector<128x128xf32>
    %cst_28 = arith.constant dense<0.000000e+00> : vector<8x128xf32>
    %30 = tpu.matmul %28, %29, %cst_28 {dimension_numbers = #tpu.dot_dimension_numbers<[1], [0], [0], [1], [0, 0, 1, 1], [], []>} : vector<8x128xf32>, vector<128x128xf32>, vector<8x128xf32> -> vector<8x128xf32>
    %31 = arith.addf %27, %30 : vector<8x128xf32>
    %c4 = arith.constant 4 : index
    %c0_29 = arith.constant 0 : index
    %32 = vector.load %arg11[%c4, %c0_29] : memref<8x128xf32, #tpu.memory_space<vmem>>, vector<1x128xf32>
    %33 = vector.broadcast %32 : vector<1x128xf32> to vector<8x128xf32>
    %34 = arith.addf %31, %33 : vector<8x128xf32>
    %c0_30 = arith.constant 0 : index
    %c0_31 = arith.constant 0 : index
    %35 = vector.load %arg8[%c0_30, %c0_31] : memref<128x128xf32, #tpu.memory_space<vmem>>, vector<128x128xf32>
    %cst_32 = arith.constant dense<0.000000e+00> : vector<8x128xf32>
    %36 = tpu.matmul %34, %35, %cst_32 {dimension_numbers = #tpu.dot_dimension_numbers<[1], [0], [0], [1], [0, 0, 1, 1], [], []>} : vector<8x128xf32>, vector<128x128xf32>, vector<8x128xf32> -> vector<8x128xf32>
    %c5 = arith.constant 5 : index
    %c0_33 = arith.constant 0 : index
    %37 = vector.load %arg11[%c5, %c0_33] : memref<8x128xf32, #tpu.memory_space<vmem>>, vector<1x128xf32>
    %38 = vector.broadcast %37 : vector<1x128xf32> to vector<8x128xf32>
    %39 = arith.addf %36, %38 : vector<8x128xf32>
    %cst_34 = arith.constant 0.000000e+00 : f32
    %40 = vector.broadcast %cst_34 : f32 to vector<8x128xf32>
    %41 = arith.maximumf %39, %40 : vector<8x128xf32>
    %c0_35 = arith.constant 0 : index
    %c0_36 = arith.constant 0 : index
    %42 = vector.load %arg9[%c0_35, %c0_36] : memref<128x128xf32, #tpu.memory_space<vmem>>, vector<128x128xf32>
    %cst_37 = arith.constant dense<0.000000e+00> : vector<8x128xf32>
    %43 = tpu.matmul %41, %42, %cst_37 {dimension_numbers = #tpu.dot_dimension_numbers<[1], [0], [0], [1], [0, 0, 1, 1], [], []>} : vector<8x128xf32>, vector<128x128xf32>, vector<8x128xf32> -> vector<8x128xf32>
    %c6 = arith.constant 6 : index
    %c0_38 = arith.constant 0 : index
    %44 = vector.load %arg11[%c6, %c0_38] : memref<8x128xf32, #tpu.memory_space<vmem>>, vector<1x128xf32>
    %45 = vector.broadcast %44 : vector<1x128xf32> to vector<8x128xf32>
    %46 = arith.addf %43, %45 : vector<8x128xf32>
    %cst_39 = arith.constant 0.000000e+00 : f32
    %47 = vector.broadcast %cst_39 : f32 to vector<8x128xf32>
    %48 = arith.maximumf %46, %47 : vector<8x128xf32>
    %c0_40 = arith.constant 0 : index
    %c0_41 = arith.constant 0 : index
    %49 = vector.load %arg10[%c0_40, %c0_41] : memref<128x128xf32, #tpu.memory_space<vmem>>, vector<128x128xf32>
    %cst_42 = arith.constant dense<0.000000e+00> : vector<8x128xf32>
    %50 = tpu.matmul %48, %49, %cst_42 {dimension_numbers = #tpu.dot_dimension_numbers<[1], [0], [0], [1], [0, 0, 1, 1], [], []>} : vector<8x128xf32>, vector<128x128xf32>, vector<8x128xf32> -> vector<8x128xf32>
    %c7 = arith.constant 7 : index
    %c0_43 = arith.constant 0 : index
    %51 = vector.load %arg11[%c7, %c0_43] : memref<8x128xf32, #tpu.memory_space<vmem>>, vector<1x128xf32>
    %52 = vector.broadcast %51 : vector<1x128xf32> to vector<8x128xf32>
    %53 = arith.addf %50, %52 : vector<8x128xf32>
    %c0_44 = arith.constant 0 : index
    %c128 = arith.constant 128 : index
    %54 = vector.load %arg12[%c0_44, %c128] : memref<8x256xf32, #tpu.memory_space<vmem>>, vector<8x128xf32>
    tpu.vector_store %arg12[%c0_44, %c128], %53 {strides = array<i32>} : memref<8x256xf32, #tpu.memory_space<vmem>>, vector<8x128xf32>,
    return
  }
  func.func @transform_0(%arg0: i32) -> (i32, i32) {
    %c0_i32 = arith.constant 0 : i32
    %c0_i32_0 = arith.constant 0 : i32
    return %arg0, %c0_i32 : i32, i32
  }
  func.func @transform_1(%arg0: i32) -> (i32, i32) {
    %c0_i32 = arith.constant 0 : i32
    %c0_i32_0 = arith.constant 0 : i32
    %c0_i32_1 = arith.constant 0 : i32
    return %c0_i32, %c0_i32_0 : i32, i32
  }
  func.func @transform_2(%arg0: i32) -> (i32, i32) {
    %c0_i32 = arith.constant 0 : i32
    %c0_i32_0 = arith.constant 0 : i32
    %c0_i32_1 = arith.constant 0 : i32
    return %c0_i32, %c0_i32_0 : i32, i32
  }
  func.func @transform_3(%arg0: i32) -> (i32, i32) {
    %c0_i32 = arith.constant 0 : i32
    %c0_i32_0 = arith.constant 0 : i32
    %c0_i32_1 = arith.constant 0 : i32
    return %c0_i32, %c0_i32_0 : i32, i32
  }
  func.func @transform_4(%arg0: i32) -> (i32, i32) {
    %c0_i32 = arith.constant 0 : i32
    %c0_i32_0 = arith.constant 0 : i32
    %c0_i32_1 = arith.constant 0 : i32
    return %c0_i32, %c0_i32_0 : i32, i32
  }
  func.func @transform_5(%arg0: i32) -> (i32, i32) {
    %c0_i32 = arith.constant 0 : i32
    %c0_i32_0 = arith.constant 0 : i32
    %c0_i32_1 = arith.constant 0 : i32
    return %c0_i32, %c0_i32_0 : i32, i32
  }
  func.func @transform_6(%arg0: i32) -> (i32, i32) {
    %c0_i32 = arith.constant 0 : i32
    %c0_i32_0 = arith.constant 0 : i32
    %c0_i32_1 = arith.constant 0 : i32
    return %c0_i32, %c0_i32_0 : i32, i32
  }
  func.func @transform_7(%arg0: i32) -> (i32, i32) {
    %c0_i32 = arith.constant 0 : i32
    %c0_i32_0 = arith.constant 0 : i32
    %c0_i32_1 = arith.constant 0 : i32
    return %c0_i32, %c0_i32_0 : i32, i32
  }
  func.func @transform_8(%arg0: i32) -> (i32, i32) {
    %c0_i32 = arith.constant 0 : i32
    %c0_i32_0 = arith.constant 0 : i32
    %c0_i32_1 = arith.constant 0 : i32
    return %c0_i32, %c0_i32_0 : i32, i32
  }
  func.func @transform_9(%arg0: i32) -> (i32, i32) {
    %c0_i32 = arith.constant 0 : i32
    %c0_i32_0 = arith.constant 0 : i32
    %c0_i32_1 = arith.constant 0 : i32
    return %c0_i32, %c0_i32_0 : i32, i32
  }
  func.func @transform_10(%arg0: i32) -> (i32, i32) {
    %c0_i32 = arith.constant 0 : i32
    %c0_i32_0 = arith.constant 0 : i32
    %c0_i32_1 = arith.constant 0 : i32
    return %c0_i32, %c0_i32_0 : i32, i32
  }
  func.func @transform_11(%arg0: i32) -> (i32, i32) {
    %c0_i32 = arith.constant 0 : i32
    %c0_i32_0 = arith.constant 0 : i32
    return %arg0, %c0_i32 : i32, i32
  }
}

</mosaic_0001>

<llo_original>
// kernel: _forward_impl.1
$region0: #{_forward_impl.1}
  #allocation0 [shape = 'u32[]', space=smem, size = 0x4, offset = 0x4, fixed_abs, tag = 'smem constant byte address 0x4 - core index']
  #allocation1 [shape = 'u32[72,128]{1,0:T(1,128)}', space=vmem, size = 0x9000, scoped, tag = 'internal scratch']
  %s0 = inlined_call_operand.vmem [shape: f32[16,256], index: 0, kind: input, shape index: {}]
  %s1 = inlined_call_operand.vmem [shape: f32[256,128], index: 1, kind: input, shape index: {}]
  %s2 = inlined_call_operand.vmem [shape: f32[128,128], index: 2, kind: input, shape index: {}]
  %s3 = inlined_call_operand.vmem [shape: f32[128,128], index: 3, kind: input, shape index: {}]
  %s4 = inlined_call_operand.vmem [shape: f32[128,128], index: 4, kind: input, shape index: {}]
  %s5 = inlined_call_operand.vmem [shape: f32[128,128], index: 5, kind: input, shape index: {}]
  %s6 = inlined_call_operand.vmem [shape: f32[128,128], index: 6, kind: input, shape index: {}]
  %s7 = inlined_call_operand.vmem [shape: f32[128,128], index: 7, kind: input, shape index: {}]
  %s8 = inlined_call_operand.vmem [shape: f32[128,128], index: 8, kind: input, shape index: {}]
  %s9 = inlined_call_operand.vmem [shape: f32[128,128], index: 9, kind: input, shape index: {}]
  %s10 = inlined_call_operand.vmem [shape: f32[8,128], index: 10, kind: input, shape index: {}]
  %s11 = inlined_call_operand.vmem [shape: f32[16,256], index: 11, kind: output, shape index: {}]
  %s12 = sld [smem:[#allocation0]]
  $region77: #{_forward_impl.1} parent=0
    _
  %s14 = ssub.s32 1, %s12
  %s15 = scalar_select 0, %s14, %s12
  loop: start=0, step=1, limit=4
  $region2: #{_forward_impl.1} parent=0 // loop_pre_header
    _
  $region3: #{_forward_impl.1} parent=0 // loop_header
    %s17 = sphi 0, %s21
    %p18 = scmp.ge.s32.totalorder %s17, 4
    %s27 = sphi 0, %s29
    %s30 = sphi 0, %s27
    %s31 = sphi 0, %s30
    %s47 = sphi 0, %s31
    %s51 = sphi 0, %s51
    %s53 = sphi 0, %s51
    %s54 = sphi 0, %s53
    %s68 = sphi 0, %s54
    %s72 = sphi 0, %s72
    %s74 = sphi 0, %s72
    %s75 = sphi 0, %s74
    %s89 = sphi 0, %s75
    %s93 = sphi 0, %s93
    %s95 = sphi 0, %s93
    %s96 = sphi 0, %s95
    %s110 = sphi 0, %s96
    %s114 = sphi 0, %s114
    %s116 = sphi 0, %s114
    %s117 = sphi 0, %s116
    %s131 = sphi 0, %s117
    %s135 = sphi 0, %s135
    %s137 = sphi 0, %s135
    %s138 = sphi 0, %s137
    %s152 = sphi 0, %s138
    %s156 = sphi 0, %s156
    %s158 = sphi 0, %s156
    %s159 = sphi 0, %s158
    %s173 = sphi 0, %s159
    %s177 = sphi 0, %s177
    %s179 = sphi 0, %s177
    %s180 = sphi 0, %s179
    %s194 = sphi 0, %s180
    %s198 = sphi 0, %s198
    %s200 = sphi 0, %s198
    %s201 = sphi 0, %s200
    %s215 = sphi 0, %s201
    %s219 = sphi 0, %s219
    %s221 = sphi 0, %s219
    %s222 = sphi 0, %s221
    %s236 = sphi 0, %s222
    %s240 = sphi 0, %s240
    %s242 = sphi 0, %s240
    %s243 = sphi 0, %s242
    %s257 = sphi 0, %s243
    %s263 = sphi 0, %s265
    %s266 = sphi 0, %s263
    %s267 = sphi 0, %s266
    %s283 = sphi 0, %s267
  $region4: #{_forward_impl.1} parent=0 // loop_header_branch
    %20 = sbr.rel (%p18) target = $region8
  $region5: #{_forward_impl.1} parent=0 // loop_body
    %s22 = ssub.s32 %s17, 1
    %s23 = ssub.s32 %s17, 2
    %s24 = sadd.s32 %s17, 1
    %s25 = ssub.s32 %s17, %s24
    %p26 = scmp.eq.s32.totalorder %s25, 0
    %s28 = sadd.s32 %s27, 1
    %s29 = scalar_select %p26, %s27, %s28
    %p32 = pneg %p26
    %p33 = scmp.eq.s32.totalorder %s17, 1
    %p34 = por %p32, %p33
    %p35 = scmp.ne.s32.totalorder %s27, %s30
    %p36 = scmp.eq.s32.totalorder %s17, 0
    %p37 = por %p35, %p36
    %p38 = scmp.ne.s32.totalorder %s27, %s30
    %p39 = scmp.eq.s32.totalorder %s22, 1
    %p40 = por %p38, %p39
    %p41 = scmp.ne.s32.totalorder %s30, %s31
    %p42 = scmp.eq.s32.totalorder %s22, 0
    %p43 = por %p41, %p42
    %p44 = scmp.ne.s32.totalorder %s30, %s31
    %p45 = scmp.eq.s32.totalorder %s23, 1
    %p46 = por %p44, %p45
    %p48 = scmp.ne.s32.totalorder %s31, %s47
    %p49 = scmp.eq.s32.totalorder %s23, 0
    %p50 = por %p48, %p49
    %s52 = sadd.s32 %s51, 1
    %p55 = scmp.eq.s32.totalorder %s17, 1
    %p56 = scmp.ne.s32.totalorder %s51, %s53
    %p57 = scmp.eq.s32.totalorder %s17, 0
    %p58 = por %p56, %p57
    %p59 = scmp.ne.s32.totalorder %s51, %s53
    %p60 = scmp.eq.s32.totalorder %s22, 1
    %p61 = por %p59, %p60
    %p62 = scmp.ne.s32.totalorder %s53, %s54
    %p63 = scmp.eq.s32.totalorder %s22, 0
    %p64 = por %p62, %p63
    %p65 = scmp.ne.s32.totalorder %s53, %s54
    %p66 = scmp.eq.s32.totalorder %s23, 1
    %p67 = por %p65, %p66
    %p69 = scmp.ne.s32.totalorder %s54, %s68
    %p70 = scmp.eq.s32.totalorder %s23, 0
    %p71 = por %p69, %p70
    %s73 = sadd.s32 %s72, 1
    %p76 = scmp.eq.s32.totalorder %s17, 1
    %p77 = scmp.ne.s32.totalorder %s72, %s74
    %p78 = scmp.eq.s32.totalorder %s17, 0
    %p79 = por %p77, %p78
    %p80 = scmp.ne.s32.totalorder %s72, %s74
    %p81 = scmp.eq.s32.totalorder %s22, 1
    %p82 = por %p80, %p81
    %p83 = scmp.ne.s32.totalorder %s74, %s75
    %p84 = scmp.eq.s32.totalorder %s22, 0
    %p85 = por %p83, %p84
    %p86 = scmp.ne.s32.totalorder %s74, %s75
    %p87 = scmp.eq.s32.totalorder %s23, 1
    %p88 = por %p86, %p87
    %p90 = scmp.ne.s32.totalorder %s75, %s89
    %p91 = scmp.eq.s32.totalorder %s23, 0
    %p92 = por %p90, %p91
    %s94 = sadd.s32 %s93, 1
    %p97 = scmp.eq.s32.totalorder %s17, 1
    %p98 = scmp.ne.s32.totalorder %s93, %s95
    %p99 = scmp.eq.s32.totalorder %s17, 0
    %p100 = por %p98, %p99
    %p101 = scmp.ne.s32.totalorder %s93, %s95
    %p102 = scmp.eq.s32.totalorder %s22, 1
    %p103 = por %p101, %p102
    %p104 = scmp.ne.s32.totalorder %s95, %s96
    %p105 = scmp.eq.s32.totalorder %s22, 0
    %p106 = por %p104, %p105
    %p107 = scmp.ne.s32.totalorder %s95, %s96
    %p108 = scmp.eq.s32.totalorder %s23, 1
    %p109 = por %p107, %p108
    %p111 = scmp.ne.s32.totalorder %s96, %s110
    %p112 = scmp.eq.s32.totalorder %s23, 0
    %p113 = por %p111, %p112
    %s115 = sadd.s32 %s114, 1
    %p118 = scmp.eq.s32.totalorder %s17, 1
    %p119 = scmp.ne.s32.totalorder %s114, %s116
    %p120 = scmp.eq.s32.totalorder %s17, 0
    %p121 = por %p119, %p120
    %p122 = scmp.ne.s32.totalorder %s114, %s116
    %p123 = scmp.eq.s32.totalorder %s22, 1
    %p124 = por %p122, %p123
    %p125 = scmp.ne.s32.totalorder %s116, %s117
    %p126 = scmp.eq.s32.totalorder %s22, 0
    %p127 = por %p125, %p126
    %p128 = scmp.ne.s32.totalorder %s116, %s117
    %p129 = scmp.eq.s32.totalorder %s23, 1
    %p130 = por %p128, %p129
    %p132 = scmp.ne.s32.totalorder %s117, %s131
    %p133 = scmp.eq.s32.totalorder %s23, 0
    %p134 = por %p132, %p133
    %s136 = sadd.s32 %s135, 1
    %p139 = scmp.eq.s32.totalorder %s17, 1
    %p140 = scmp.ne.s32.totalorder %s135, %s137
    %p141 = scmp.eq.s32.totalorder %s17, 0
    %p142 = por %p140, %p141
    %p143 = scmp.ne.s32.totalorder %s135, %s137
    %p144 = scmp.eq.s32.totalorder %s22, 1
    %p145 = por %p143, %p144
    %p146 = scmp.ne.s32.totalorder %s137, %s138
    %p147 = scmp.eq.s32.totalorder %s22, 0
    %p148 = por %p146, %p147
    %p149 = scmp.ne.s32.totalorder %s137, %s138
    %p150 = scmp.eq.s32.totalorder %s23, 1
    %p151 = por %p149, %p150
    %p153 = scmp.ne.s32.totalorder %s138, %s152
    %p154 = scmp.eq.s32.totalorder %s23, 0
    %p155 = por %p153, %p154
    %s157 = sadd.s32 %s156, 1
    %p160 = scmp.eq.s32.totalorder %s17, 1
    %p161 = scmp.ne.s32.totalorder %s156, %s158
    %p162 = scmp.eq.s32.totalorder %s17, 0
    %p163 = por %p161, %p162
    %p164 = scmp.ne.s32.totalorder %s156, %s158
    %p165 = scmp.eq.s32.totalorder %s22, 1
    %p166 = por %p164, %p165
    %p167 = scmp.ne.s32.totalorder %s158, %s159
    %p168 = scmp.eq.s32.totalorder %s22, 0
    %p169 = por %p167, %p168
    %p170 = scmp.ne.s32.totalorder %s158, %s159
    %p171 = scmp.eq.s32.totalorder %s23, 1
    %p172 = por %p170, %p171
    %p174 = scmp.ne.s32.totalorder %s159, %s173
    %p175 = scmp.eq.s32.totalorder %s23, 0
    %p176 = por %p174, %p175
    %s178 = sadd.s32 %s177, 1
    %p181 = scmp.eq.s32.totalorder %s17, 1
    %p182 = scmp.ne.s32.totalorder %s177, %s179
    %p183 = scmp.eq.s32.totalorder %s17, 0
    %p184 = por %p182, %p183
    %p185 = scmp.ne.s32.totalorder %s177, %s179
    %p186 = scmp.eq.s32.totalorder %s22, 1
    %p187 = por %p185, %p186
    %p188 = scmp.ne.s32.totalorder %s179, %s180
    %p189 = scmp.eq.s32.totalorder %s22, 0
    %p190 = por %p188, %p189
    %p191 = scmp.ne.s32.totalorder %s179, %s180
    %p192 = scmp.eq.s32.totalorder %s23, 1
    %p193 = por %p191, %p192
    %p195 = scmp.ne.s32.totalorder %s180, %s194
    %p196 = scmp.eq.s32.totalorder %s23, 0
    %p197 = por %p195, %p196
    %s199 = sadd.s32 %s198, 1
    %p202 = scmp.eq.s32.totalorder %s17, 1
    %p203 = scmp.ne.s32.totalorder %s198, %s200
    %p204 = scmp.eq.s32.totalorder %s17, 0
    %p205 = por %p203, %p204
    %p206 = scmp.ne.s32.totalorder %s198, %s200
    %p207 = scmp.eq.s32.totalorder %s22, 1
    %p208 = por %p206, %p207
    %p209 = scmp.ne.s32.totalorder %s200, %s201
    %p210 = scmp.eq.s32.totalorder %s22, 0
    %p211 = por %p209, %p210
    %p212 = scmp.ne.s32.totalorder %s200, %s201
    %p213 = scmp.eq.s32.totalorder %s23, 1
    %p214 = por %p212, %p213
    %p216 = scmp.ne.s32.totalorder %s201, %s215
    %p217 = scmp.eq.s32.totalorder %s23, 0
    %p218 = por %p216, %p217
    %s220 = sadd.s32 %s219, 1
    %p223 = scmp.eq.s32.totalorder %s17, 1
    %p224 = scmp.ne.s32.totalorder %s219, %s221
    %p225 = scmp.eq.s32.totalorder %s17, 0
    %p226 = por %p224, %p225
    %p227 = scmp.ne.s32.totalorder %s219, %s221
    %p228 = scmp.eq.s32.totalorder %s22, 1
    %p229 = por %p227, %p228
    %p230 = scmp.ne.s32.totalorder %s221, %s222
    %p231 = scmp.eq.s32.totalorder %s22, 0
    %p232 = por %p230, %p231
    %p233 = scmp.ne.s32.totalorder %s221, %s222
    %p234 = scmp.eq.s32.totalorder %s23, 1
    %p235 = por %p233, %p234
    %p237 = scmp.ne.s32.totalorder %s222, %s236
    %p238 = scmp.eq.s32.totalorder %s23, 0
    %p239 = por %p237, %p238
    %s241 = sadd.s32 %s240, 1
    %p244 = scmp.eq.s32.totalorder %s17, 1
    %p245 = scmp.ne.s32.totalorder %s240, %s242
    %p246 = scmp.eq.s32.totalorder %s17, 0
    %p247 = por %p245, %p246
    %p248 = scmp.ne.s32.totalorder %s240, %s242
    %p249 = scmp.eq.s32.totalorder %s22, 1
    %p250 = por %p248, %p249
    %p251 = scmp.ne.s32.totalorder %s242, %s243
    %p252 = scmp.eq.s32.totalorder %s22, 0
    %p253 = por %p251, %p252
    %p254 = scmp.ne.s32.totalorder %s242, %s243
    %p255 = scmp.eq.s32.totalorder %s23, 1
    %p256 = por %p254, %p255
    %p258 = scmp.ne.s32.totalorder %s243, %s257
    %p259 = scmp.eq.s32.totalorder %s23, 0
    %p260 = por %p258, %p259
    %s261 = ssub.s32 %s17, %s24
    %p262 = scmp.eq.s32.totalorder %s261, 0
    %s264 = sadd.s32 %s263, 1
    %s265 = scalar_select %p262, %s263, %s264
    %p268 = pneg %p262
    %p269 = scmp.eq.s32.totalorder %s17, 1
    %p270 = por %p268, %p269
    %p271 = scmp.ne.s32.totalorder %s263, %s266
    %p272 = scmp.eq.s32.totalorder %s17, 0
    %p273 = por %p271, %p272
    %p274 = scmp.ne.s32.totalorder %s263, %s266
    %p275 = scmp.eq.s32.totalorder %s22, 1
    %p276 = por %p274, %p275
    %p277 = scmp.ne.s32.totalorder %s266, %s267
    %p278 = scmp.eq.s32.totalorder %s22, 0
    %p279 = por %p277, %p278
    %p280 = scmp.ne.s32.totalorder %s266, %s267
    %p281 = scmp.eq.s32.totalorder %s23, 1
    %p282 = por %p280, %p281
    %p284 = scmp.ne.s32.totalorder %s267, %s283
    %p285 = scmp.eq.s32.totalorder %s23, 0
    %p286 = por %p284, %p285
    %p287 = scmp.le.s32.totalorder 1, %s17
    %p288 = scmp.lt.s32.totalorder %s17, 3
    %p289 = pnand %p287, %p288
    %p290 = pneg %p289
    // Predicated region
    $region9: #{_forward_impl.1} parent=5 // pred_check
      _
    $region10: #{_forward_impl.1} parent=5 // pred_check_branch
      %292 = sbr.rel (%p289) target = $region12
    $region11: #{_forward_impl.1} parent=5 // pred_region
      %s293 = ssub.s32 %s17, 1
      // Predicated region
      $region13: #{_forward_impl.1} parent=11 // pred_check
        %p294 = pneg %p64
      $region14: #{_forward_impl.1} parent=11 // pred_check_branch
        %296 = sbr.rel (%p294) target = $region16
      $region15: #{_forward_impl.1} parent=11 // pred_region
        _
      $region16: #{_forward_impl.1} parent=11 // pred_fallthru
        _
      // Predicated region
      $region17: #{_forward_impl.1} parent=11 // pred_check
        %p297 = pneg %p85
      $region18: #{_forward_impl.1} parent=11 // pred_check_branch
        %299 = sbr.rel (%p297) target = $region20
      $region19: #{_forward_impl.1} parent=11 // pred_region
        _
      $region20: #{_forward_impl.1} parent=11 // pred_fallthru
        _
      // Predicated region
      $region21: #{_forward_impl.1} parent=11 // pred_check
        %p300 = pneg %p106
      $region22: #{_forward_impl.1} parent=11 // pred_check_branch
        %302 = sbr.rel (%p300) target = $region24
      $region23: #{_forward_impl.1} parent=11 // pred_region
        _
      $region24: #{_forward_impl.1} parent=11 // pred_fallthru
        _
      // Predicated region
      $region25: #{_forward_impl.1} parent=11 // pred_check
        %p303 = pneg %p127
      $region26: #{_forward_impl.1} parent=11 // pred_check_branch
        %305 = sbr.rel (%p303) target = $region28
      $region27: #{_forward_impl.1} parent=11 // pred_region
        _
      $region28: #{_forward_impl.1} parent=11 // pred_fallthru
        _
      // Predicated region
      $region29: #{_forward_impl.1} parent=11 // pred_check
        %p306 = pneg %p148
      $region30: #{_forward_impl.1} parent=11 // pred_check_branch
        %308 = sbr.rel (%p306) target = $region32
      $region31: #{_forward_impl.1} parent=11 // pred_region
        _
      $region32: #{_forward_impl.1} parent=11 // pred_fallthru
        _
      // Predicated region
      $region33: #{_forward_impl.1} parent=11 // pred_check
        %p309 = pneg %p169
      $region34: #{_forward_impl.1} parent=11 // pred_check_branch
        %311 = sbr.rel (%p309) target = $region36
      $region35: #{_forward_impl.1} parent=11 // pred_region
        _
      $region36: #{_forward_impl.1} parent=11 // pred_fallthru
        _
      // Predicated region
      $region37: #{_forward_impl.1} parent=11 // pred_check
        %p312 = pneg %p190
      $region38: #{_forward_impl.1} parent=11 // pred_check_branch
        %314 = sbr.rel (%p312) target = $region40
      $region39: #{_forward_impl.1} parent=11 // pred_region
        _
      $region40: #{_forward_impl.1} parent=11 // pred_fallthru
        _
      // Predicated region
      $region41: #{_forward_impl.1} parent=11 // pred_check
        %p315 = pneg %p211
      $region42: #{_forward_impl.1} parent=11 // pred_check_branch
        %317 = sbr.rel (%p315) target = $region44
      $region43: #{_forward_impl.1} parent=11 // pred_region
        _
      $region44: #{_forward_impl.1} parent=11 // pred_fallthru
        _
      // Predicated region
      $region45: #{_forward_impl.1} parent=11 // pred_check
        %p318 = pneg %p232
      $region46: #{_forward_impl.1} parent=11 // pred_check_branch
        %320 = sbr.rel (%p318) target = $region48
      $region47: #{_forward_impl.1} parent=11 // pred_region
        _
      $region48: #{_forward_impl.1} parent=11 // pred_fallthru
        _
      // Predicated region
      $region49: #{_forward_impl.1} parent=11 // pred_check
        %p321 = pneg %p253
      $region50: #{_forward_impl.1} parent=11 // pred_check_branch
        %323 = sbr.rel (%p321) target = $region52
      $region51: #{_forward_impl.1} parent=11 // pred_region
        _
      $region52: #{_forward_impl.1} parent=11 // pred_fallthru
        _
    $region12: #{_forward_impl.1} parent=5 // pred_fallthru
      _
    %p324 = scmp.lt.s32.totalorder %s17, 2
    // Predicated region
    $region53: #{_forward_impl.1} parent=5 // pred_check
      %p325 = pneg %p324
    $region54: #{_forward_impl.1} parent=5 // pred_check_branch
      %327 = sbr.rel (%p325) target = $region56
    $region55: #{_forward_impl.1} parent=5 // pred_region
      // Predicated region
      $region57: #{_forward_impl.1} parent=55 // pred_check
        %p328 = pneg %p37
      $region58: #{_forward_impl.1} parent=55 // pred_check_branch
        %330 = sbr.rel (%p328) target = $region60
      $region59: #{_forward_impl.1} parent=55 // pred_region
        %p331 = scmp.lt.s32.totalorder %s17, 1
        %s332 = scalar_select %p331, %s17, 1
        %s333 = smul.addr %s332, 2
        %s334 = smul.addr %s333, 8
        %s335 = scalar_lea.vmem %s0, %s334
      $region60: #{_forward_impl.1} parent=55 // pred_fallthru
        _
    $region56: #{_forward_impl.1} parent=5 // pred_fallthru
      _
    %p336 = scmp.le.s32.totalorder 1, %s17
    %p337 = scmp.lt.s32.totalorder %s17, 3
    %p338 = pnand %p336, %p337
    %p339 = pneg %p338
    // Predicated region
    $region61: #{_forward_impl.1} parent=5 // pred_check
      _
    $region62: #{_forward_impl.1} parent=5 // pred_check_branch
      %341 = sbr.rel (%p338) target = $region64
    $region63: #{_forward_impl.1} parent=5 // pred_region
      %s342 = ssub.s32 %s17, 1
      %p343 = scmp.lt.s32.totalorder %s22, 1
      %s344 = scalar_select %p343, %s22, 1
      %s345 = smul.addr %s344, 2
      %s346 = smul.addr %s345, 8
      %s347 = scalar_lea.vmem %s0, %s346
      %p348 = pneg %p43
      %p349 = pneg %p40
      %p350 = pneg %p64
      %p351 = pneg %p61
      %p352 = pneg %p85
      %p353 = pneg %p82
      %p354 = pneg %p106
      %p355 = pneg %p103
      %p356 = pneg %p127
      %p357 = pneg %p124
      %p358 = pneg %p148
      %p359 = pneg %p145
      %p360 = pneg %p169
      %p361 = pneg %p166
      %p362 = pneg %p190
      %p363 = pneg %p187
      %p364 = pneg %p211
      %p365 = pneg %p208
      %p366 = pneg %p232
      %p367 = pneg %p229
      %p368 = pneg %p253
      %p369 = pneg %p250
      %p370 = pneg %p279
      %p371 = pneg %p276
      %p372 = scmp.lt.s32.totalorder %s22, 1
      %s373 = scalar_select %p372, %s22, 1
      %s374 = smul.addr %s373, 2
      %s375 = smul.addr %s374, 8
      %s376 = scalar_lea.vmem %s11, %s375
      %p377 = scmp.lt.s32.totalorder %s22, 1
      %s378 = scalar_select %p377, %s22, 1
      %s379 = smul.addr %s378, 2
      %s380 = smul.addr %s379, 8
      %s381 = scalar_lea.vmem %s0, %s380
      %p382 = scmp.lt.s32.totalorder %s22, 1
      %s383 = scalar_select %p382, %s22, 1
      %s384 = smul.addr %s383, 2
      %s385 = smul.addr %s384, 8
      %s386 = scalar_lea.vmem %s11, %s385
      %v387 = vld [vmem:[%s381] sm:$0xff]
      %v388 = vld [vmem:[%s381 + $0x8] sm:$0xff]
      %v389 = vld [vmem:[%s1] sm:$0xff]
      %v390 = vld [vmem:[%s1 + $0x8] sm:$0xff]
      %v391 = vld [vmem:[%s1 + $0x10] sm:$0xff]
      %v392 = vld [vmem:[%s1 + $0x18] sm:$0xff]
      %v393 = vld [vmem:[%s1 + $0x20] sm:$0xff]
      %v394 = vld [vmem:[%s1 + $0x28] sm:$0xff]
      %v395 = vld [vmem:[%s1 + $0x30] sm:$0xff]
      %v396 = vld [vmem:[%s1 + $0x38] sm:$0xff]
      %v397 = vld [vmem:[%s1 + $0x40] sm:$0xff]
      %v398 = vld [vmem:[%s1 + $0x48] sm:$0xff]
      %v399 = vld [vmem:[%s1 + $0x50] sm:$0xff]
      %v400 = vld [vmem:[%s1 + $0x58] sm:$0xff]
      %v401 = vld [vmem:[%s1 + $0x60] sm:$0xff]
      %v402 = vld [vmem:[%s1 + $0x68] sm:$0xff]
      %v403 = vld [vmem:[%s1 + $0x70] sm:$0xff]
      %v404 = vld [vmem:[%s1 + $0x78] sm:$0xff]
      %v405 = vld [vmem:[%s1 + $0x80] sm:$0xff]
      %v406 = vld [vmem:[%s1 + $0x88] sm:$0xff]
      %v407 = vld [vmem:[%s1 + $0x90] sm:$0xff]
      %v408 = vld [vmem:[%s1 + $0x98] sm:$0xff]
      %v409 = vld [vmem:[%s1 + $0xa0] sm:$0xff]
      %v410 = vld [vmem:[%s1 + $0xa8] sm:$0xff]
      %v411 = vld [vmem:[%s1 + $0xb0] sm:$0xff]
      %v412 = vld [vmem:[%s1 + $0xb8] sm:$0xff]
      %v413 = vld [vmem:[%s1 + $0xc0] sm:$0xff]
      %v414 = vld [vmem:[%s1 + $0xc8] sm:$0xff]
      %v415 = vld [vmem:[%s1 + $0xd0] sm:$0xff]
      %v416 = vld [vmem:[%s1 + $0xd8] sm:$0xff]
      %v417 = vld [vmem:[%s1 + $0xe0] sm:$0xff]
      %v418 = vld [vmem:[%s1 + $0xe8] sm:$0xff]
      %v419 = vld [vmem:[%s1 + $0xf0] sm:$0xff]
      %v420 = vld [vmem:[%s1 + $0xf8] sm:$0xff]
      %v421 = vld [vmem:[%s10] sm:$0x1]
      %v422 = vperm.slane %v421, 0
      %423 = vmatpush.msra.mxu0 %v404
      %424 = vmatpush.msra.mxu0 %v403
      %425 = vmatpush.msra.mxu0 %v402
      %426 = vmatpush.msra.mxu0 %v401
      %427 = vmatpush.msra.mxu0 %v400
      %428 = vmatpush.msra.mxu0 %v399
      %429 = vmatpush.msra.mxu0 %v398
      %430 = vmatpush.msra.mxu0 %v397
      %431 = vmatpush.msra.mxu0 %v396
      %432 = vmatpush.msra.mxu0 %v395
      %433 = vmatpush.msra.mxu0 %v394
      %434 = vmatpush.msra.mxu0 %v393
      %435 = vmatpush.msra.mxu0 %v392
      %436 = vmatpush.msra.mxu0 %v391
      %437 = vmatpush.msra.mxu0 %v390
      %438 = vmatpush.msra.mxu0 %v389
      %439 = vmatmul.f32.gmra.mxu0 %v387
      %v440 = vpop.f32.mrf.mxu0
      %v441 = vadd.f32 %v422, %v440
      %442 = vdwg.mxu0
      %443 = vmatpush.msra.mxu0 %v420
      %444 = vmatpush.msra.mxu0 %v419
      %445 = vmatpush.msra.mxu0 %v418
      %446 = vmatpush.msra.mxu0 %v417
      %447 = vmatpush.msra.mxu0 %v416
      %448 = vmatpush.msra.mxu0 %v415
      %449 = vmatpush.msra.mxu0 %v414
      %450 = vmatpush.msra.mxu0 %v413
      %451 = vmatpush.msra.mxu0 %v412
      %452 = vmatpush.msra.mxu0 %v411
      %453 = vmatpush.msra.mxu0 %v410
      %454 = vmatpush.msra.mxu0 %v409
      %455 = vmatpush.msra.mxu0 %v408
      %456 = vmatpush.msra.mxu0 %v407
      %457 = vmatpush.msra.mxu0 %v406
      %458 = vmatpush.msra.mxu0 %v405
      %459 = vmatmul.f32.gmra.mxu0 %v388
      %v460 = vpop.f32.mrf.mxu0
      %v461 = vadd.f32 %v441, %v460
      %462 = vdwg.mxu0
      %v463 = vld [vmem:[%s2] sm:$0xff]
      %v464 = vld [vmem:[%s2 + $0x8] sm:$0xff]
      %v465 = vld [vmem:[%s2 + $0x10] sm:$0xff]
      %v466 = vld [vmem:[%s2 + $0x18] sm:$0xff]
      %v467 = vld [vmem:[%s2 + $0x20] sm:$0xff]
      %v468 = vld [vmem:[%s2 + $0x28] sm:$0xff]
      %v469 = vld [vmem:[%s2 + $0x30] sm:$0xff]
      %v470 = vld [vmem:[%s2 + $0x38] sm:$0xff]
      %v471 = vld [vmem:[%s2 + $0x40] sm:$0xff]
      %v472 = vld [vmem:[%s2 + $0x48] sm:$0xff]
      %v473 = vld [vmem:[%s2 + $0x50] sm:$0xff]
      %v474 = vld [vmem:[%s2 + $0x58] sm:$0xff]
      %v475 = vld [vmem:[%s2 + $0x60] sm:$0xff]
      %v476 = vld [vmem:[%s2 + $0x68] sm:$0xff]
      %v477 = vld [vmem:[%s2 + $0x70] sm:$0xff]
      %v478 = vld [vmem:[%s2 + $0x78] sm:$0xff]
      %v479 = vld [vmem:[%s10 + $0x1] sm:$0x1]
      %v480 = vperm.slane %v479, 0
      %481 = vmatpush.msra.mxu0 %v478
      %482 = vmatpush.msra.mxu0 %v477
      %483 = vmatpush.msra.mxu0 %v476
      %484 = vmatpush.msra.mxu0 %v475
      %485 = vmatpush.msra.mxu0 %v474
      %486 = vmatpush.msra.mxu0 %v473
      %487 = vmatpush.msra.mxu0 %v472
      %488 = vmatpush.msra.mxu0 %v471
      %489 = vmatpush.msra.mxu0 %v470
      %490 = vmatpush.msra.mxu0 %v469
      %491 = vmatpush.msra.mxu0 %v468
      %492 = vmatpush.msra.mxu0 %v467
      %493 = vmatpush.msra.mxu0 %v466
      %494 = vmatpush.msra.mxu0 %v465
      %495 = vmatpush.msra.mxu0 %v464
      %496 = vmatpush.msra.mxu0 %v463
      %497 = vmatmul.f32.gmra.mxu0 %v461
      %v498 = vpop.f32.mrf.mxu0
      %v499 = vadd.f32 %v480, %v498
      %500 = vdwg.mxu0
      %v501 = vmax.f32 %v499, 0.0
      %v502 = vld [vmem:[%s3] sm:$0xff]
      %v503 = vld [vmem:[%s3 + $0x8] sm:$0xff]
      %v504 = vld [vmem:[%s3 + $0x10] sm:$0xff]
      %v505 = vld [vmem:[%s3 + $0x18] sm:$0xff]
      %v506 = vld [vmem:[%s3 + $0x20] sm:$0xff]
      %v507 = vld [vmem:[%s3 + $0x28] sm:$0xff]
      %v508 = vld [vmem:[%s3 + $0x30] sm:$0xff]
      %v509 = vld [vmem:[%s3 + $0x38] sm:$0xff]
      %v510 = vld [vmem:[%s3 + $0x40] sm:$0xff]
      %v511 = vld [vmem:[%s3 + $0x48] sm:$0xff]
      %v512 = vld [vmem:[%s3 + $0x50] sm:$0xff]
      %v513 = vld [vmem:[%s3 + $0x58] sm:$0xff]
      %v514 = vld [vmem:[%s3 + $0x60] sm:$0xff]
      %v515 = vld [vmem:[%s3 + $0x68] sm:$0xff]
      %v516 = vld [vmem:[%s3 + $0x70] sm:$0xff]
      %v517 = vld [vmem:[%s3 + $0x78] sm:$0xff]
      %v518 = vld [vmem:[%s10 + $0x2] sm:$0x1]
      %v519 = vperm.slane %v518, 0
      %520 = vmatpush.msra.mxu0 %v517
      %521 = vmatpush.msra.mxu0 %v516
      %522 = vmatpush.msra.mxu0 %v515
      %523 = vmatpush.msra.mxu0 %v514
      %524 = vmatpush.msra.mxu0 %v513
      %525 = vmatpush.msra.mxu0 %v512
      %526 = vmatpush.msra.mxu0 %v511
      %527 = vmatpush.msra.mxu0 %v510
      %528 = vmatpush.msra.mxu0 %v509
      %529 = vmatpush.msra.mxu0 %v508
      %530 = vmatpush.msra.mxu0 %v507
      %531 = vmatpush.msra.mxu0 %v506
      %532 = vmatpush.msra.mxu0 %v505
      %533 = vmatpush.msra.mxu0 %v504
      %534 = vmatpush.msra.mxu0 %v503
      %535 = vmatpush.msra.mxu0 %v502
      %536 = vmatmul.f32.gmra.mxu0 %v501
      %v537 = vpop.f32.mrf.mxu0
      %v538 = vadd.f32 %v519, %v537
      %539 = vdwg.mxu0
      %v540 = vmax.f32 %v538, 0.0
      %v541 = vld [vmem:[%s4] sm:$0xff]
      %v542 = vld [vmem:[%s4 + $0x8] sm:$0xff]
      %v543 = vld [vmem:[%s4 + $0x10] sm:$0xff]
      %v544 = vld [vmem:[%s4 + $0x18] sm:$0xff]
      %v545 = vld [vmem:[%s4 + $0x20] sm:$0xff]
      %v546 = vld [vmem:[%s4 + $0x28] sm:$0xff]
      %v547 = vld [vmem:[%s4 + $0x30] sm:$0xff]
      %v548 = vld [vmem:[%s4 + $0x38] sm:$0xff]
      %v549 = vld [vmem:[%s4 + $0x40] sm:$0xff]
      %v550 = vld [vmem:[%s4 + $0x48] sm:$0xff]
      %v551 = vld [vmem:[%s4 + $0x50] sm:$0xff]
      %v552 = vld [vmem:[%s4 + $0x58] sm:$0xff]
      %v553 = vld [vmem:[%s4 + $0x60] sm:$0xff]
      %v554 = vld [vmem:[%s4 + $0x68] sm:$0xff]
      %v555 = vld [vmem:[%s4 + $0x70] sm:$0xff]
      %v556 = vld [vmem:[%s4 + $0x78] sm:$0xff]
      %v557 = vld [vmem:[%s10 + $0x3] sm:$0x1]
      %v558 = vperm.slane %v557, 0
      %559 = vmatpush.msra.mxu0 %v556
      %560 = vmatpush.msra.mxu0 %v555
      %561 = vmatpush.msra.mxu0 %v554
      %562 = vmatpush.msra.mxu0 %v553
      %563 = vmatpush.msra.mxu0 %v552
      %564 = vmatpush.msra.mxu0 %v551
      %565 = vmatpush.msra.mxu0 %v550
      %566 = vmatpush.msra.mxu0 %v549
      %567 = vmatpush.msra.mxu0 %v548
      %568 = vmatpush.msra.mxu0 %v547
      %569 = vmatpush.msra.mxu0 %v546
      %570 = vmatpush.msra.mxu0 %v545
      %571 = vmatpush.msra.mxu0 %v544
      %572 = vmatpush.msra.mxu0 %v543
      %573 = vmatpush.msra.mxu0 %v542
      %574 = vmatpush.msra.mxu0 %v541
      %575 = vmatmul.f32.gmra.mxu0 %v540
      %v576 = vpop.f32.mrf.mxu0
      %v577 = vadd.f32 %v558, %v576
      %578 = vdwg.mxu0
      %579 = vst [vmem:[%s386] sm:$0xff] %v577
      %v580 = vld [vmem:[%s5] sm:$0xff]
      %v581 = vld [vmem:[%s5 + $0x8] sm:$0xff]
      %v582 = vld [vmem:[%s5 + $0x10] sm:$0xff]
      %v583 = vld [vmem:[%s5 + $0x18] sm:$0xff]
      %v584 = vld [vmem:[%s5 + $0x20] sm:$0xff]
      %v585 = vld [vmem:[%s5 + $0x28] sm:$0xff]
      %v586 = vld [vmem:[%s5 + $0x30] sm:$0xff]
      %v587 = vld [vmem:[%s5 + $0x38] sm:$0xff]
      %v588 = vld [vmem:[%s5 + $0x40] sm:$0xff]
      %v589 = vld [vmem:[%s5 + $0x48] sm:$0xff]
      %v590 = vld [vmem:[%s5 + $0x50] sm:$0xff]
      %v591 = vld [vmem:[%s5 + $0x58] sm:$0xff]
      %v592 = vld [vmem:[%s5 + $0x60] sm:$0xff]
      %v593 = vld [vmem:[%s5 + $0x68] sm:$0xff]
      %v594 = vld [vmem:[%s5 + $0x70] sm:$0xff]
      %v595 = vld [vmem:[%s5 + $0x78] sm:$0xff]
      %v596 = vld [vmem:[%s381] sm:$0xff]
      %v597 = vld [vmem:[%s6] sm:$0xff]
      %v598 = vld [vmem:[%s6 + $0x8] sm:$0xff]
      %v599 = vld [vmem:[%s6 + $0x10] sm:$0xff]
      %v600 = vld [vmem:[%s6 + $0x18] sm:$0xff]
      %v601 = vld [vmem:[%s6 + $0x20] sm:$0xff]
      %v602 = vld [vmem:[%s6 + $0x28] sm:$0xff]
      %v603 = vld [vmem:[%s6 + $0x30] sm:$0xff]
      %v604 = vld [vmem:[%s6 + $0x38] sm:$0xff]
      %v605 = vld [vmem:[%s6 + $0x40] sm:$0xff]
      %v606 = vld [vmem:[%s6 + $0x48] sm:$0xff]
      %v607 = vld [vmem:[%s6 + $0x50] sm:$0xff]
      %v608 = vld [vmem:[%s6 + $0x58] sm:$0xff]
      %v609 = vld [vmem:[%s6 + $0x60] sm:$0xff]
      %v610 = vld [vmem:[%s6 + $0x68] sm:$0xff]
      %v611 = vld [vmem:[%s6 + $0x70] sm:$0xff]
      %v612 = vld [vmem:[%s6 + $0x78] sm:$0xff]
      %613 = vmatpush.msra.mxu0 %v612
      %614 = vmatpush.msra.mxu0 %v611
      %615 = vmatpush.msra.mxu0 %v610
      %616 = vmatpush.msra.mxu0 %v609
      %617 = vmatpush.msra.mxu0 %v608
      %618 = vmatpush.msra.mxu0 %v607
      %619 = vmatpush.msra.mxu0 %v606
      %620 = vmatpush.msra.mxu0 %v605
      %621 = vmatpush.msra.mxu0 %v604
      %622 = vmatpush.msra.mxu0 %v603
      %623 = vmatpush.msra.mxu0 %v602
      %624 = vmatpush.msra.mxu0 %v601
      %625 = vmatpush.msra.mxu0 %v600
      %626 = vmatpush.msra.mxu0 %v599
      %627 = vmatpush.msra.mxu0 %v598
      %628 = vmatpush.msra.mxu0 %v597
      %629 = vmatmul.f32.gmra.mxu0 %v596
      %v630 = vpop.f32.mrf.mxu0
      %v631 = vadd.f32 0.0, %v630
      %632 = vdwg.mxu0
      %633 = vmatpush.msra.mxu0 %v595
      %634 = vmatpush.msra.mxu0 %v594
      %635 = vmatpush.msra.mxu0 %v593
      %636 = vmatpush.msra.mxu0 %v592
      %637 = vmatpush.msra.mxu0 %v591
      %638 = vmatpush.msra.mxu0 %v590
      %639 = vmatpush.msra.mxu0 %v589
      %640 = vmatpush.msra.mxu0 %v588
      %641 = vmatpush.msra.mxu0 %v587
      %642 = vmatpush.msra.mxu0 %v586
      %643 = vmatpush.msra.mxu0 %v585
      %644 = vmatpush.msra.mxu0 %v584
      %645 = vmatpush.msra.mxu0 %v583
      %646 = vmatpush.msra.mxu0 %v582
      %647 = vmatpush.msra.mxu0 %v581
      %648 = vmatpush.msra.mxu0 %v580
      %649 = vmatmul.f32.gmra.mxu0 %v577
      %v650 = vpop.f32.mrf.mxu0
      %v651 = vadd.f32 %v631, %v650
      %652 = vdwg.mxu0
      %v653 = vld [vmem:[%s10 + $0x4] sm:$0x1]
      %v654 = vperm.slane %v653, 0
      %v655 = vadd.f32 %v651, %v654
      %v656 = vld [vmem:[%s7] sm:$0xff]
      %v657 = vld [vmem:[%s7 + $0x8] sm:$0xff]
      %v658 = vld [vmem:[%s7 + $0x10] sm:$0xff]
      %v659 = vld [vmem:[%s7 + $0x18] sm:$0xff]
      %v660 = vld [vmem:[%s7 + $0x20] sm:$0xff]
      %v661 = vld [vmem:[%s7 + $0x28] sm:$0xff]
      %v662 = vld [vmem:[%s7 + $0x30] sm:$0xff]
      %v663 = vld [vmem:[%s7 + $0x38] sm:$0xff]
      %v664 = vld [vmem:[%s7 + $0x40] sm:$0xff]
      %v665 = vld [vmem:[%s7 + $0x48] sm:$0xff]
      %v666 = vld [vmem:[%s7 + $0x50] sm:$0xff]
      %v667 = vld [vmem:[%s7 + $0x58] sm:$0xff]
      %v668 = vld [vmem:[%s7 + $0x60] sm:$0xff]
      %v669 = vld [vmem:[%s7 + $0x68] sm:$0xff]
      %v670 = vld [vmem:[%s7 + $0x70] sm:$0xff]
      %v671 = vld [vmem:[%s7 + $0x78] sm:$0xff]
      %v672 = vld [vmem:[%s10 + $0x5] sm:$0x1]
      %v673 = vperm.slane %v672, 0
      %674 = vmatpush.msra.mxu0 %v671
      %675 = vmatpush.msra.mxu0 %v670
      %676 = vmatpush.msra.mxu0 %v669
      %677 = vmatpush.msra.mxu0 %v668
      %678 = vmatpush.msra.mxu0 %v667
      %679 = vmatpush.msra.mxu0 %v666
      %680 = vmatpush.msra.mxu0 %v665
      %681 = vmatpush.msra.mxu0 %v664
      %682 = vmatpush.msra.mxu0 %v663
      %683 = vmatpush.msra.mxu0 %v662
      %684 = vmatpush.msra.mxu0 %v661
      %685 = vmatpush.msra.mxu0 %v660
      %686 = vmatpush.msra.mxu0 %v659
      %687 = vmatpush.msra.mxu0 %v658
      %688 = vmatpush.msra.mxu0 %v657
      %689 = vmatpush.msra.mxu0 %v656
      %690 = vmatmul.f32.gmra.mxu0 %v655
      %v691 = vpop.f32.mrf.mxu0
      %v692 = vadd.f32 %v673, %v691
      %693 = vdwg.mxu0
      %v694 = vmax.f32 %v692, 0.0
      %v695 = vld [vmem:[%s8] sm:$0xff]
      %v696 = vld [vmem:[%s8 + $0x8] sm:$0xff]
      %v697 = vld [vmem:[%s8 + $0x10] sm:$0xff]
      %v698 = vld [vmem:[%s8 + $0x18] sm:$0xff]
      %v699 = vld [vmem:[%s8 + $0x20] sm:$0xff]
      %v700 = vld [vmem:[%s8 + $0x28] sm:$0xff]
      %v701 = vld [vmem:[%s8 + $0x30] sm:$0xff]
      %v702 = vld [vmem:[%s8 + $0x38] sm:$0xff]
      %v703 = vld [vmem:[%s8 + $0x40] sm:$0xff]
      %v704 = vld [vmem:[%s8 + $0x48] sm:$0xff]
      %v705 = vld [vmem:[%s8 + $0x50] sm:$0xff]
      %v706 = vld [vmem:[%s8 + $0x58] sm:$0xff]
      %v707 = vld [vmem:[%s8 + $0x60] sm:$0xff]
      %v708 = vld [vmem:[%s8 + $0x68] sm:$0xff]
      %v709 = vld [vmem:[%s8 + $0x70] sm:$0xff]
      %v710 = vld [vmem:[%s8 + $0x78] sm:$0xff]
      %v711 = vld [vmem:[%s10 + $0x6] sm:$0x1]
      %v712 = vperm.slane %v711, 0
      %713 = vmatpush.msra.mxu0 %v710
      %714 = vmatpush.msra.mxu0 %v709
      %715 = vmatpush.msra.mxu0 %v708
      %716 = vmatpush.msra.mxu0 %v707
      %717 = vmatpush.msra.mxu0 %v706
      %718 = vmatpush.msra.mxu0 %v705
      %719 = vmatpush.msra.mxu0 %v704
      %720 = vmatpush.msra.mxu0 %v703
      %721 = vmatpush.msra.mxu0 %v702
      %722 = vmatpush.msra.mxu0 %v701
      %723 = vmatpush.msra.mxu0 %v700
      %724 = vmatpush.msra.mxu0 %v699
      %725 = vmatpush.msra.mxu0 %v698
      %726 = vmatpush.msra.mxu0 %v697
      %727 = vmatpush.msra.mxu0 %v696
      %728 = vmatpush.msra.mxu0 %v695
      %729 = vmatmul.f32.gmra.mxu0 %v694
      %v730 = vpop.f32.mrf.mxu0
      %v731 = vadd.f32 %v712, %v730
      %732 = vdwg.mxu0
      %v733 = vmax.f32 %v731, 0.0
      %v734 = vld [vmem:[%s9] sm:$0xff]
      %v735 = vld [vmem:[%s9 + $0x8] sm:$0xff]
      %v736 = vld [vmem:[%s9 + $0x10] sm:$0xff]
      %v737 = vld [vmem:[%s9 + $0x18] sm:$0xff]
      %v738 = vld [vmem:[%s9 + $0x20] sm:$0xff]
      %v739 = vld [vmem:[%s9 + $0x28] sm:$0xff]
      %v740 = vld [vmem:[%s9 + $0x30] sm:$0xff]
      %v741 = vld [vmem:[%s9 + $0x38] sm:$0xff]
      %v742 = vld [vmem:[%s9 + $0x40] sm:$0xff]
      %v743 = vld [vmem:[%s9 + $0x48] sm:$0xff]
      %v744 = vld [vmem:[%s9 + $0x50] sm:$0xff]
      %v745 = vld [vmem:[%s9 + $0x58] sm:$0xff]
      %v746 = vld [vmem:[%s9 + $0x60] sm:$0xff]
      %v747 = vld [vmem:[%s9 + $0x68] sm:$0xff]
      %v748 = vld [vmem:[%s9 + $0x70] sm:$0xff]
      %v749 = vld [vmem:[%s9 + $0x78] sm:$0xff]
      %v750 = vld [vmem:[%s10 + $0x7] sm:$0x1]
      %v751 = vperm.slane %v750, 0
      %752 = vmatpush.msra.mxu0 %v749
      %753 = vmatpush.msra.mxu0 %v748
      %754 = vmatpush.msra.mxu0 %v747
      %755 = vmatpush.msra.mxu0 %v746
      %756 = vmatpush.msra.mxu0 %v745
      %757 = vmatpush.msra.mxu0 %v744
      %758 = vmatpush.msra.mxu0 %v743
      %759 = vmatpush.msra.mxu0 %v742
      %760 = vmatpush.msra.mxu0 %v741
      %761 = vmatpush.msra.mxu0 %v740
      %762 = vmatpush.msra.mxu0 %v739
      %763 = vmatpush.msra.mxu0 %v738
      %764 = vmatpush.msra.mxu0 %v737
      %765 = vmatpush.msra.mxu0 %v736
      %766 = vmatpush.msra.mxu0 %v735
      %767 = vmatpush.msra.mxu0 %v734
      %768 = vmatmul.f32.gmra.mxu0 %v733
      %v769 = vpop.f32.mrf.mxu0
      %v770 = vadd.f32 %v751, %v769
      %771 = vdwg.mxu0
      %772 = vst [vmem:[%s386 + $0x8] sm:$0xff] %v770
      %p773 = scmp.lt.s32.totalorder %s22, 1
      %s774 = scalar_select %p773, %s22, 1
      %s775 = smul.addr %s774, 2
      %s776 = smul.addr %s775, 8
      %s777 = scalar_lea.vmem %s11, %s776
      // Predicated region
      $region65: #{_forward_impl.1} parent=63 // pred_check
        %p778 = pneg %p276
      $region66: #{_forward_impl.1} parent=63 // pred_check_branch
        %780 = sbr.rel (%p778) target = $region68
      $region67: #{_forward_impl.1} parent=63 // pred_region
        _
      $region68: #{_forward_impl.1} parent=63 // pred_fallthru
        _
    $region64: #{_forward_impl.1} parent=5 // pred_fallthru
      _
    %p781 = scmp.le.s32.totalorder 2, %s17
    // Predicated region
    $region69: #{_forward_impl.1} parent=5 // pred_check
      %p782 = pneg %p781
    $region70: #{_forward_impl.1} parent=5 // pred_check_branch
      %784 = sbr.rel (%p782) target = $region72
    $region71: #{_forward_impl.1} parent=5 // pred_region
      %s785 = ssub.s32 %s17, 2
      // Predicated region
      $region73: #{_forward_impl.1} parent=71 // pred_check
        %p786 = pneg %p282
      $region74: #{_forward_impl.1} parent=71 // pred_check_branch
        %788 = sbr.rel (%p786) target = $region76
      $region75: #{_forward_impl.1} parent=71 // pred_region
        %p789 = scmp.lt.s32.totalorder %s23, 1
        %s790 = scalar_select %p789, %s23, 1
        %s791 = smul.addr %s790, 2
        %s792 = smul.addr %s791, 8
        %s793 = scalar_lea.vmem %s11, %s792
      $region76: #{_forward_impl.1} parent=71 // pred_fallthru
        _
    $region72: #{_forward_impl.1} parent=5 // pred_fallthru
      _
  $region6: #{_forward_impl.1} parent=0 // loop_footer
    %s21 = sadd.s32 1, %s17
  $region7: #{_forward_impl.1} parent=0 // loop_footer_branch
    %16 = sbr.rel target = $region3
  $region8: #{_forward_impl.1} parent=0 // loop_exit
    _

</llo_original>
